<compile_context>
chip_gen: v7x
topology: tpu7x:2x2x1
jax: 0.10.0
libtpu: 0.0.40
codegen_flags: <defaults>
</compile_context>

<pallas_src>
import jax
import jax.numpy as jnp
from jax.experimental import pallas as pl
from jax.experimental.pallas import tpu as pltpu

DISC_COEFF = 100.0
MSE_COEFF = 10.0

LANES = 1024      # lane-dense slab width (multiple of 128 -> unmasked vector ops)
ROW_TILE = 512    # (512, 1024) f32 tile = 2 MiB per double-buffered input buffer
NCORES = 2        # leading "parallel" grid axis; uses both v7x TensorCores


def _round_up(x, m):
    return ((x + m - 1) // m) * m


def gan_loss_kernel(gen_p_ref, gen_t_ref, disc_p_ref, disc_t_ref,
                    ssq_ref, disc_ref, acc_ref):
    step = pl.program_id(1)
    last_step = pl.num_programs(1) - 1

    @pl.when(step == 0)
    def _init():
        acc_ref[...] = jnp.zeros_like(acc_ref)

    # Steady state: stream one (row_tile, LANES) tile of each generator tensor
    # and fold it into per-lane partial sums of squared error.
    gp = gen_p_ref[...].astype(jnp.float32)
    gt = gen_t_ref[...].astype(jnp.float32)
    diff = gp - gt
    acc_ref[...] += jnp.sum(diff * diff, axis=0, keepdims=True)

    @pl.when(step == last_step)
    def _finalize():
        # Per-core partial sum-of-squares lives in row 0 of this core's slab;
        # remaining rows are zero so the wrapper can sum the whole output.
        ssq_ref[...] = jnp.zeros_like(ssq_ref)
        ssq_ref[pl.ds(0, 1), :] = acc_ref[...]

        # BCE over the tiny [N, 1] discriminator tensors (PyTorch BCELoss
        # clamps each log term at -100).  Computed redundantly by each core;
        # negligible next to the streamed MSE.
        dp = disc_p_ref[...].astype(jnp.float32)
        dt = disc_t_ref[...].astype(jnp.float32)
        log_p = jnp.maximum(jnp.log(dp), -100.0)
        log_1mp = jnp.maximum(jnp.log(1.0 - dp), -100.0)
        bce = jnp.sum(-(dt * log_p + (1.0 - dt) * log_1mp)) / jnp.float32(dp.size)
        disc_ref[...] = jnp.full(disc_ref.shape, -bce, dtype=jnp.float32)


def _gan_loss_impl(gen_preds, gen_targets, disc_preds, disc_targets):
    n_gen = gen_preds.size

    # Lane-dense slab + zero padding (padding adds 0 to the squared-error sum;
    # the mean below divides by the true element count, so it stays exact).
    rows_min = max(1, -(-n_gen // LANES))
    row_tile = min(ROW_TILE, _round_up(-(-rows_min // NCORES), 8))
    rows = _round_up(rows_min, NCORES * row_tile)
    steps = rows // (NCORES * row_tile)

    gp_flat = jnp.ravel(gen_preds)
    gt_flat = jnp.ravel(gen_targets)
    pad = rows * LANES - n_gen
    if pad:
        gp_flat = jnp.pad(gp_flat, (0, pad))
        gt_flat = jnp.pad(gt_flat, (0, pad))
    gp2 = gp_flat.reshape(rows, LANES)
    gt2 = gt_flat.reshape(rows, LANES)

    nd = disc_preds.shape[0]
    dp2 = disc_preds.reshape(nd, 1)
    dt2 = disc_targets.reshape(nd, 1)

    gen_spec = pl.BlockSpec((row_tile, LANES), lambda c, i: (c * steps + i, 0))
    disc_spec = pl.BlockSpec((nd, 1), lambda c, i: (0, 0))

    itemsize = jnp.dtype(gen_preds.dtype).itemsize
    cost = pl.CostEstimate(
        flops=3 * n_gen + 10 * nd,
        transcendentals=2 * nd,
        bytes_accessed=2 * n_gen * itemsize + 4 * nd * 4
                        + NCORES * 8 * (LANES + 128) * 4)

    ssq_out, disc_out = pl.pallas_call(
        gan_loss_kernel,
        out_shape=(jax.ShapeDtypeStruct((NCORES * 8, LANES), jnp.float32),
                   jax.ShapeDtypeStruct((NCORES * 8, 128), jnp.float32)),
        grid_spec=pltpu.PrefetchScalarGridSpec(
            num_scalar_prefetch=0,
            grid=(NCORES, steps),
            in_specs=[gen_spec, gen_spec, disc_spec, disc_spec],
            out_specs=(pl.BlockSpec((8, LANES), lambda c, i: (c, 0)),
                       pl.BlockSpec((8, 128), lambda c, i: (c, 0))),
            scratch_shapes=[pltpu.VMEM((1, LANES), jnp.float32)]),
        compiler_params=pltpu.CompilerParams(
            dimension_semantics=("parallel", "arbitrary"),
            vmem_limit_bytes=32 * 1024 * 1024),
        cost_estimate=cost,
    )(gp2, gt2, dp2, dt2)

    # Finalize: exact mean over the TRUE element count + loss combination.
    # (Rows 1..7 of each core's slab are zero-filled, so a plain sum is exact.)
    ssq_total = jnp.sum(ssq_out)
    mse_loss = ssq_total / jnp.float32(n_gen)
    disc_loss = disc_out[0, 0]
    combined = DISC_COEFF * disc_loss + MSE_COEFF * mse_loss
    # Aux pair corresponds to the torch module's .item() values but stays on
    # device (no host sync); callers can float() them if they need Python floats.
    return combined, (disc_loss, mse_loss)


gan_loss_with_mse = jax.jit(_gan_loss_impl)


def _reference(gen_preds, gen_targets, disc_preds, disc_targets):
    mse = jnp.mean((gen_preds.astype(jnp.float32)
                    - gen_targets.astype(jnp.float32)) ** 2)
    dp = disc_preds.astype(jnp.float32)
    dt = disc_targets.astype(jnp.float32)
    bce = jnp.mean(-(dt * jnp.maximum(jnp.log(dp), -100.0)
                     + (1.0 - dt) * jnp.maximum(jnp.log(1.0 - dp), -100.0)))
    disc_loss = -bce
    return DISC_COEFF * disc_loss + MSE_COEFF * mse, disc_loss, mse


if __name__ == "__main__":
    key = jax.random.PRNGKey(0)
    k1, k2, k3, k4 = jax.random.split(key, 4)

    # Small shapes consistent with the module's forward: generator output is an
    # NCHW image batch; discriminator output is [N, 1] probabilities in (0, 1).
    gen_preds = jax.random.normal(k1, (2, 4, 16, 16), dtype=jnp.float32)
    gen_targets = jax.random.normal(k2, (2, 4, 16, 16), dtype=jnp.float32)
    disc_preds = jax.random.uniform(k3, (2, 1), dtype=jnp.float32,
                                    minval=0.05, maxval=0.95)
    disc_targets = (jax.random.uniform(k4, (2, 1)) > 0.5).astype(jnp.float32)

    combined, (disc_l, mse_l) = gan_loss_with_mse(
        gen_preds, gen_targets, disc_preds, disc_targets)
    combined = jax.block_until_ready(combined)

    ref_comb, ref_disc, ref_mse = _reference(
        gen_preds, gen_targets, disc_preds, disc_targets)

    assert jnp.allclose(combined, ref_comb, rtol=1e-4, atol=1e-4), (combined, ref_comb)
    assert abs(float(disc_l) - float(ref_disc)) < 1e-4, (disc_l, ref_disc)
    assert abs(float(mse_l) - float(ref_mse)) < 1e-4, (mse_l, ref_mse)

    print("KERNEL_OK")
</pallas_src>

<mosaic_0001>
module attributes {stable_mosaic.version = 11 : i64} {
  func.func @gan_loss_kernel(%arg0: i32, %arg1: i32, %arg2: memref<8x1024xf32, #tpu.memory_space<vmem>>, %arg3: memref<8x1024xf32, #tpu.memory_space<vmem>>, %arg4: memref<2x1xf32, #tpu.memory_space<vmem>>, %arg5: memref<2x1xf32, #tpu.memory_space<vmem>>, %arg6: memref<8x1024xf32, #tpu.memory_space<vmem>>, %arg7: memref<8x128xf32, #tpu.memory_space<vmem>>, %arg8: memref<1x1024xf32, #tpu.memory_space<vmem>>) attributes {dimension_semantics = [#tpu.dimension_semantics<parallel>, #tpu.dimension_semantics<arbitrary>], iteration_bounds = array<i64: 2, 1>, scalar_prefetch = 0 : i64, scratch_operands = 1 : i64, tpu.core_type = #tpu.core_type<tc>, window_params = [{transform_indices = @transform_0, window_bounds = array<i64: 8, 1024>}, {transform_indices = @transform_1, window_bounds = array<i64: 8, 1024>}, {pipeline_mode = #tpu.pipeline_mode<synchronous>, transform_indices = @transform_2, window_bounds = array<i64: 2, 1>}, {pipeline_mode = #tpu.pipeline_mode<synchronous>, transform_indices = @transform_3, window_bounds = array<i64: 2, 1>}, {transform_indices = @transform_4, window_bounds = array<i64: 8, 1024>}, {transform_indices = @transform_5, window_bounds = array<i64: 8, 128>}]} {
    %c0_i32 = arith.constant 0 : i32
    %0 = arith.cmpi eq, %arg1, %c0_i32 : i32
    %1 = arith.extui %0 : i1 to i32
    %c0_i32_0 = arith.constant 0 : i32
    %2 = arith.cmpi ne, %1, %c0_i32_0 : i32
    scf.if %2 {
      %cst_10 = arith.constant 0.000000e+00 : f32
      %15 = vector.broadcast %cst_10 : f32 to vector<1x1024xf32>
      %c0_11 = arith.constant 0 : index
      %c0_12 = arith.constant 0 : index
      %16 = vector.load %arg8[%c0_11, %c0_12] : memref<1x1024xf32, #tpu.memory_space<vmem>>, vector<1x1024xf32>
      tpu.vector_store %arg8[%c0_11, %c0_12], %15 {strides = array<i32>} : memref<1x1024xf32, #tpu.memory_space<vmem>>, vector<1x1024xf32>,
    } else {
    }
    %c0 = arith.constant 0 : index
    %c0_1 = arith.constant 0 : index
    %3 = vector.load %arg2[%c0, %c0_1] : memref<8x1024xf32, #tpu.memory_space<vmem>>, vector<8x1024xf32>
    %c0_2 = arith.constant 0 : index
    %c0_3 = arith.constant 0 : index
    %4 = vector.load %arg3[%c0_2, %c0_3] : memref<8x1024xf32, #tpu.memory_space<vmem>>, vector<8x1024xf32>
    %5 = arith.subf %3, %4 : vector<8x1024xf32>
    %c0_4 = arith.constant 0 : index
    %c0_5 = arith.constant 0 : index
    %6 = vector.load %arg8[%c0_4, %c0_5] : memref<1x1024xf32, #tpu.memory_space<vmem>>, vector<1x1024xf32>
    %7 = arith.mulf %5, %5 : vector<8x1024xf32>
    %cst = arith.constant dense<0.000000e+00> : vector<1024xf32>
    %8 = vector.multi_reduction <add>, %7, %cst [0] : vector<8x1024xf32> to vector<1024xf32>
    %9 = vector.shape_cast %8 : vector<1024xf32> to vector<1x1024xf32>
    %10 = arith.addf %6, %9 : vector<1x1024xf32>
    %c0_6 = arith.constant 0 : index
    %c0_7 = arith.constant 0 : index
    %11 = vector.load %arg8[%c0_6, %c0_7] : memref<1x1024xf32, #tpu.memory_space<vmem>>, vector<1x1024xf32>
    tpu.vector_store %arg8[%c0_6, %c0_7], %10 {strides = array<i32>} : memref<1x1024xf32, #tpu.memory_space<vmem>>, vector<1x1024xf32>,
    %c0_i32_8 = arith.constant 0 : i32
    %12 = arith.cmpi eq, %arg1, %c0_i32_8 : i32
    %13 = arith.extui %12 : i1 to i32
    %c0_i32_9 = arith.constant 0 : i32
    %14 = arith.cmpi ne, %13, %c0_i32_9 : i32
    scf.if %14 {
      %cst_10 = arith.constant 0.000000e+00 : f32
      %15 = vector.broadcast %cst_10 : f32 to vector<8x1024xf32>
      %c0_11 = arith.constant 0 : index
      %c0_12 = arith.constant 0 : index
      %16 = vector.load %arg6[%c0_11, %c0_12] : memref<8x1024xf32, #tpu.memory_space<vmem>>, vector<8x1024xf32>
      tpu.vector_store %arg6[%c0_11, %c0_12], %15 {strides = array<i32>} : memref<8x1024xf32, #tpu.memory_space<vmem>>, vector<8x1024xf32>,
      %c0_13 = arith.constant 0 : index
      %c0_14 = arith.constant 0 : index
      %17 = vector.load %arg8[%c0_13, %c0_14] : memref<1x1024xf32, #tpu.memory_space<vmem>>, vector<1x1024xf32>
      %c0_15 = arith.constant 0 : index
      %c0_16 = arith.constant 0 : index
      %18 = vector.load %arg6[%c0_15, %c0_16] : memref<8x1024xf32, #tpu.memory_space<vmem>>, vector<1x1024xf32>
      tpu.vector_store %arg6[%c0_15, %c0_16], %17 {strides = array<i32>} : memref<8x1024xf32, #tpu.memory_space<vmem>>, vector<1x1024xf32>,
      %c0_17 = arith.constant 0 : index
      %c0_18 = arith.constant 0 : index
      %19 = vector.load %arg4[%c0_17, %c0_18] : memref<2x1xf32, #tpu.memory_space<vmem>>, vector<2x1xf32>
      %c0_19 = arith.constant 0 : index
      %c0_20 = arith.constant 0 : index
      %20 = vector.load %arg5[%c0_19, %c0_20] : memref<2x1xf32, #tpu.memory_space<vmem>>, vector<2x1xf32>
      %21 = math.log %19 : vector<2x1xf32>
      %cst_21 = arith.constant -1.000000e+02 : f32
      %22 = vector.broadcast %cst_21 : f32 to vector<2x1xf32>
      %23 = arith.maximumf %21, %22 : vector<2x1xf32>
      %cst_22 = arith.constant 1.000000e+00 : f32
      %24 = vector.broadcast %cst_22 : f32 to vector<2x1xf32>
      %25 = arith.subf %24, %19 : vector<2x1xf32>
      %26 = math.log %25 : vector<2x1xf32>
      %cst_23 = arith.constant -1.000000e+02 : f32
      %27 = vector.broadcast %cst_23 : f32 to vector<2x1xf32>
      %28 = arith.maximumf %26, %27 : vector<2x1xf32>
      %29 = arith.mulf %20, %23 : vector<2x1xf32>
      %cst_24 = arith.constant 1.000000e+00 : f32
      %30 = vector.broadcast %cst_24 : f32 to vector<2x1xf32>
      %31 = arith.subf %30, %20 : vector<2x1xf32>
      %32 = arith.mulf %31, %28 : vector<2x1xf32>
      %33 = arith.addf %29, %32 : vector<2x1xf32>
      %cst_25 = arith.constant 0.000000e+00 : f32
      %34 = vector.broadcast %cst_25 : f32 to vector<2x1xf32>
      %35 = arith.subf %34, %33 : vector<2x1xf32>
      %36 = vector.shape_cast %35 : vector<2x1xf32> to vector<1x2x1xf32>
      %cst_26 = arith.constant dense<0.000000e+00> : vector<1xf32>
      %37 = vector.multi_reduction <add>, %36, %cst_26 [1, 2] : vector<1x2x1xf32> to vector<1xf32>
      %38 = vector.shape_cast %37 : vector<1xf32> to vector<1x1x1xf32>
      %39 = vector.extract %38[0, 0, 0] : f32 from vector<1x1x1xf32>
      %cst_27 = arith.constant 2.000000e+00 : f32
      %40 = arith.divf %39, %cst_27 : f32
      %cst_28 = arith.constant 0.000000e+00 : f32
      %41 = arith.subf %cst_28, %40 : f32
      %42 = vector.broadcast %41 : f32 to vector<8x128xf32>
      %c0_29 = arith.constant 0 : index
      %c0_30 = arith.constant 0 : index
      %43 = vector.load %arg7[%c0_29, %c0_30] : memref<8x128xf32, #tpu.memory_space<vmem>>, vector<8x128xf32>
      tpu.vector_store %arg7[%c0_29, %c0_30], %42 {strides = array<i32>} : memref<8x128xf32, #tpu.memory_space<vmem>>, vector<8x128xf32>,
    } else {
    }
    return
  }
  func.func @transform_0(%arg0: i32, %arg1: i32) -> (i32, i32) {
    %c1_i32 = arith.constant 1 : i32
    %0 = arith.muli %arg0, %c1_i32 : i32
    %1 = arith.addi %0, %arg1 : i32
    %c0_i32 = arith.constant 0 : i32
    %c0_i32_0 = arith.constant 0 : i32
    return %1, %c0_i32 : i32, i32
  }
  func.func @transform_1(%arg0: i32, %arg1: i32) -> (i32, i32) {
    %c1_i32 = arith.constant 1 : i32
    %0 = arith.muli %arg0, %c1_i32 : i32
    %1 = arith.addi %0, %arg1 : i32
    %c0_i32 = arith.constant 0 : i32
    %c0_i32_0 = arith.constant 0 : i32
    return %1, %c0_i32 : i32, i32
  }
  func.func @transform_2(%arg0: i32, %arg1: i32) -> (i32, i32) {
    %c0_i32 = arith.constant 0 : i32
    %c0_i32_0 = arith.constant 0 : i32
    %c0_i32_1 = arith.constant 0 : i32
    return %c0_i32, %c0_i32_0 : i32, i32
  }
  func.func @transform_3(%arg0: i32, %arg1: i32) -> (i32, i32) {
    %c0_i32 = arith.constant 0 : i32
    %c0_i32_0 = arith.constant 0 : i32
    %c0_i32_1 = arith.constant 0 : i32
    return %c0_i32, %c0_i32_0 : i32, i32
  }
  func.func @transform_4(%arg0: i32, %arg1: i32) -> (i32, i32) {
    %c0_i32 = arith.constant 0 : i32
    %c0_i32_0 = arith.constant 0 : i32
    return %arg0, %c0_i32 : i32, i32
  }
  func.func @transform_5(%arg0: i32, %arg1: i32) -> (i32, i32) {
    %c0_i32 = arith.constant 0 : i32
    %c0_i32_0 = arith.constant 0 : i32
    return %arg0, %c0_i32 : i32, i32
  }
}

</mosaic_0001>

<llo_original>
// kernel: _gan_loss_impl.1
$region0: #{_gan_loss_impl.1}
  #allocation0 [shape = 'u32[]', space=smem, size = 0x4, offset = 0x4, fixed_abs, tag = 'smem constant byte address 0x4 - core index']
  #allocation1 [shape = 'u32[144,128]{1,0:T(1,128)}', space=vmem, size = 0x12000, scoped, tag = 'internal scratch']
  #allocation2 [shape = 'f32[1,1024]{1,0:T(1,128)}', space=vmem, size = 0x1000, scoped, tag = 'scratch operand']
  %s0 = inlined_call_operand.vmem [shape: f32[16,1024], index: 0, kind: input, shape index: {}]
  %s1 = inlined_call_operand.vmem [shape: f32[16,1024], index: 1, kind: input, shape index: {}]
  %s2 = inlined_call_operand.vmem [shape: f32[2,1], index: 2, kind: input, shape index: {}]
  %s3 = inlined_call_operand.vmem [shape: f32[2,1], index: 3, kind: input, shape index: {}]
  %s4 = inlined_call_operand.vmem [shape: f32[16,1024], index: 4, kind: output, shape index: {0}]
  %s5 = inlined_call_operand.vmem [shape: f32[16,128], index: 5, kind: output, shape index: {1}]
  %6 = xla_tuple %s4, %s5
  %s7 = sld [smem:[#allocation0]]
  $region65: #{_gan_loss_impl.1} parent=0
    _
  %s9 = ssub.s32 1, %s7
  %s10 = scalar_select 0, %s9, %s7
  loop: start=0, step=1, limit=4
  $region2: #{_gan_loss_impl.1} parent=0 // loop_pre_header
    _
  $region3: #{_gan_loss_impl.1} parent=0 // loop_header
    %s12 = sphi 0, %s16
    %p13 = scmp.ge.s32.totalorder %s12, 4
    %s19 = sphi 0, %s31
    %s20 = sphi 0, %s27
    %s21 = sphi 0, %s19
    %s22 = sphi 0, %s20
    %s23 = sphi 0, %s21
    %s24 = sphi 0, %s22
    %s36 = sphi 0, %s38
    %s39 = sphi 0, %s36
    %s40 = sphi 0, %s39
    %s56 = sphi 0, %s40
    %s64 = sphi 0, %s66
    %s67 = sphi 0, %s64
    %s68 = sphi 0, %s67
    %s84 = sphi 0, %s68
    %s88 = sphi 0, %s88
    %s90 = sphi 0, %s88
    %s91 = sphi 0, %s90
    %s105 = sphi 0, %s91
    %s109 = sphi 0, %s109
    %s111 = sphi 0, %s109
    %s112 = sphi 0, %s111
    %s126 = sphi 0, %s112
    %s132 = sphi 0, %s134
    %s135 = sphi 0, %s132
    %s136 = sphi 0, %s135
    %s152 = sphi 0, %s136
    %s158 = sphi 0, %s160
    %s161 = sphi 0, %s158
    %s162 = sphi 0, %s161
    %s178 = sphi 0, %s162
  $region4: #{_gan_loss_impl.1} parent=0 // loop_header_branch
    %15 = sbr.rel (%p13) target = $region8
  $region5: #{_gan_loss_impl.1} parent=0 // loop_body
    %s17 = ssub.s32 %s12, 1
    %s18 = ssub.s32 %s12, 2
    %s25 = sadd.s32 1, %s20
    %p26 = scmp.ge.s32.totalorder %s25, 1
    %s27 = scalar_select %p26, 0, %s25
    %s28 = sadd.s32 1, %s19
    %s29 = scalar_select %p26, %s28, %s19
    %p30 = scmp.ge.s32.totalorder %s29, 2
    %s31 = scalar_select %p30, 0, %s29
    %s32 = sadd.s32 %s19, %s20
    %s33 = sadd.s32 %s31, %s27
    %s34 = ssub.s32 %s32, %s33
    %p35 = scmp.eq.s32.totalorder %s34, 0
    %s37 = sadd.s32 %s36, 1
    %s38 = scalar_select %p35, %s36, %s37
    %p41 = pneg %p35
    %p42 = scmp.eq.s32.totalorder %s12, 1
    %p43 = por %p41, %p42
    %p44 = scmp.ne.s32.totalorder %s36, %s39
    %p45 = scmp.eq.s32.totalorder %s12, 0
    %p46 = por %p44, %p45
    %p47 = scmp.ne.s32.totalorder %s36, %s39
    %p48 = scmp.eq.s32.totalorder %s17, 1
    %p49 = por %p47, %p48
    %p50 = scmp.ne.s32.totalorder %s39, %s40
    %p51 = scmp.eq.s32.totalorder %s17, 0
    %p52 = por %p50, %p51
    %p53 = scmp.ne.s32.totalorder %s39, %s40
    %p54 = scmp.eq.s32.totalorder %s18, 1
    %p55 = por %p53, %p54
    %p57 = scmp.ne.s32.totalorder %s40, %s56
    %p58 = scmp.eq.s32.totalorder %s18, 0
    %p59 = por %p57, %p58
    %s60 = sadd.s32 %s19, %s20
    %s61 = sadd.s32 %s31, %s27
    %s62 = ssub.s32 %s60, %s61
    %p63 = scmp.eq.s32.totalorder %s62, 0
    %s65 = sadd.s32 %s64, 1
    %s66 = scalar_select %p63, %s64, %s65
    %p69 = pneg %p63
    %p70 = scmp.eq.s32.totalorder %s12, 1
    %p71 = por %p69, %p70
    %p72 = scmp.ne.s32.totalorder %s64, %s67
    %p73 = scmp.eq.s32.totalorder %s12, 0
    %p74 = por %p72, %p73
    %p75 = scmp.ne.s32.totalorder %s64, %s67
    %p76 = scmp.eq.s32.totalorder %s17, 1
    %p77 = por %p75, %p76
    %p78 = scmp.ne.s32.totalorder %s67, %s68
    %p79 = scmp.eq.s32.totalorder %s17, 0
    %p80 = por %p78, %p79
    %p81 = scmp.ne.s32.totalorder %s67, %s68
    %p82 = scmp.eq.s32.totalorder %s18, 1
    %p83 = por %p81, %p82
    %p85 = scmp.ne.s32.totalorder %s68, %s84
    %p86 = scmp.eq.s32.totalorder %s18, 0
    %p87 = por %p85, %p86
    %s89 = sadd.s32 %s88, 1
    %p92 = scmp.eq.s32.totalorder %s12, 1
    %p93 = scmp.ne.s32.totalorder %s88, %s90
    %p94 = scmp.eq.s32.totalorder %s12, 0
    %p95 = por %p93, %p94
    %p96 = scmp.ne.s32.totalorder %s88, %s90
    %p97 = scmp.eq.s32.totalorder %s17, 1
    %p98 = por %p96, %p97
    %p99 = scmp.ne.s32.totalorder %s90, %s91
    %p100 = scmp.eq.s32.totalorder %s17, 0
    %p101 = por %p99, %p100
    %p102 = scmp.ne.s32.totalorder %s90, %s91
    %p103 = scmp.eq.s32.totalorder %s18, 1
    %p104 = por %p102, %p103
    %p106 = scmp.ne.s32.totalorder %s91, %s105
    %p107 = scmp.eq.s32.totalorder %s18, 0
    %p108 = por %p106, %p107
    %s110 = sadd.s32 %s109, 1
    %p113 = scmp.eq.s32.totalorder %s12, 1
    %p114 = scmp.ne.s32.totalorder %s109, %s111
    %p115 = scmp.eq.s32.totalorder %s12, 0
    %p116 = por %p114, %p115
    %p117 = scmp.ne.s32.totalorder %s109, %s111
    %p118 = scmp.eq.s32.totalorder %s17, 1
    %p119 = por %p117, %p118
    %p120 = scmp.ne.s32.totalorder %s111, %s112
    %p121 = scmp.eq.s32.totalorder %s17, 0
    %p122 = por %p120, %p121
    %p123 = scmp.ne.s32.totalorder %s111, %s112
    %p124 = scmp.eq.s32.totalorder %s18, 1
    %p125 = por %p123, %p124
    %p127 = scmp.ne.s32.totalorder %s112, %s126
    %p128 = scmp.eq.s32.totalorder %s18, 0
    %p129 = por %p127, %p128
    %s130 = ssub.s32 %s19, %s31
    %p131 = scmp.eq.s32.totalorder %s130, 0
    %s133 = sadd.s32 %s132, 1
    %s134 = scalar_select %p131, %s132, %s133
    %p137 = pneg %p131
    %p138 = scmp.eq.s32.totalorder %s12, 1
    %p139 = por %p137, %p138
    %p140 = scmp.ne.s32.totalorder %s132, %s135
    %p141 = scmp.eq.s32.totalorder %s12, 0
    %p142 = por %p140, %p141
    %p143 = scmp.ne.s32.totalorder %s132, %s135
    %p144 = scmp.eq.s32.totalorder %s17, 1
    %p145 = por %p143, %p144
    %p146 = scmp.ne.s32.totalorder %s135, %s136
    %p147 = scmp.eq.s32.totalorder %s17, 0
    %p148 = por %p146, %p147
    %p149 = scmp.ne.s32.totalorder %s135, %s136
    %p150 = scmp.eq.s32.totalorder %s18, 1
    %p151 = por %p149, %p150
    %p153 = scmp.ne.s32.totalorder %s136, %s152
    %p154 = scmp.eq.s32.totalorder %s18, 0
    %p155 = por %p153, %p154
    %s156 = ssub.s32 %s19, %s31
    %p157 = scmp.eq.s32.totalorder %s156, 0
    %s159 = sadd.s32 %s158, 1
    %s160 = scalar_select %p157, %s158, %s159
    %p163 = pneg %p157
    %p164 = scmp.eq.s32.totalorder %s12, 1
    %p165 = por %p163, %p164
    %p166 = scmp.ne.s32.totalorder %s158, %s161
    %p167 = scmp.eq.s32.totalorder %s12, 0
    %p168 = por %p166, %p167
    %p169 = scmp.ne.s32.totalorder %s158, %s161
    %p170 = scmp.eq.s32.totalorder %s17, 1
    %p171 = por %p169, %p170
    %p172 = scmp.ne.s32.totalorder %s161, %s162
    %p173 = scmp.eq.s32.totalorder %s17, 0
    %p174 = por %p172, %p173
    %p175 = scmp.ne.s32.totalorder %s161, %s162
    %p176 = scmp.eq.s32.totalorder %s18, 1
    %p177 = por %p175, %p176
    %p179 = scmp.ne.s32.totalorder %s162, %s178
    %p180 = scmp.eq.s32.totalorder %s18, 0
    %p181 = por %p179, %p180
    %p182 = scmp.le.s32.totalorder 1, %s12
    %p183 = scmp.lt.s32.totalorder %s12, 3
    %p184 = pnand %p182, %p183
    %p185 = pneg %p184
    // Predicated region
    $region9: #{_gan_loss_impl.1} parent=5 // pred_check
      _
    $region10: #{_gan_loss_impl.1} parent=5 // pred_check_branch
      %187 = sbr.rel (%p184) target = $region12
    $region11: #{_gan_loss_impl.1} parent=5 // pred_region
      %s188 = ssub.s32 %s12, 1
      // Predicated region
      $region13: #{_gan_loss_impl.1} parent=11 // pred_check
        %p189 = pneg %p101
      $region14: #{_gan_loss_impl.1} parent=11 // pred_check_branch
        %191 = sbr.rel (%p189) target = $region16
      $region15: #{_gan_loss_impl.1} parent=11 // pred_region
        _
      $region16: #{_gan_loss_impl.1} parent=11 // pred_fallthru
        _
      // Predicated region
      $region17: #{_gan_loss_impl.1} parent=11 // pred_check
        %p192 = pneg %p122
      $region18: #{_gan_loss_impl.1} parent=11 // pred_check_branch
        %194 = sbr.rel (%p192) target = $region20
      $region19: #{_gan_loss_impl.1} parent=11 // pred_region
        _
      $region20: #{_gan_loss_impl.1} parent=11 // pred_fallthru
        _
    $region12: #{_gan_loss_impl.1} parent=5 // pred_fallthru
      _
    %p195 = scmp.lt.s32.totalorder %s12, 2
    // Predicated region
    $region21: #{_gan_loss_impl.1} parent=5 // pred_check
      %p196 = pneg %p195
    $region22: #{_gan_loss_impl.1} parent=5 // pred_check_branch
      %198 = sbr.rel (%p196) target = $region24
    $region23: #{_gan_loss_impl.1} parent=5 // pred_region
      // Predicated region
      $region25: #{_gan_loss_impl.1} parent=23 // pred_check
        %p199 = pneg %p46
      $region26: #{_gan_loss_impl.1} parent=23 // pred_check_branch
        %201 = sbr.rel (%p199) target = $region28
      $region27: #{_gan_loss_impl.1} parent=23 // pred_region
        %s202 = sadd.s32 %s19, %s20
        %p203 = scmp.lt.s32.totalorder %s202, 1
        %s204 = scalar_select %p203, %s202, 1
        %s205 = smul.addr %s204, 8
        %s206 = smul.addr %s205, 8
        %s207 = scalar_lea.vmem %s0, %s206
        %s208 = sadd.s32 %s19, %s20
      $region28: #{_gan_loss_impl.1} parent=23 // pred_fallthru
        _
      // Predicated region
      $region29: #{_gan_loss_impl.1} parent=23 // pred_check
        %p209 = pneg %p74
      $region30: #{_gan_loss_impl.1} parent=23 // pred_check_branch
        %211 = sbr.rel (%p209) target = $region32
      $region31: #{_gan_loss_impl.1} parent=23 // pred_region
        %s212 = sadd.s32 %s19, %s20
        %p213 = scmp.lt.s32.totalorder %s212, 1
        %s214 = scalar_select %p213, %s212, 1
        %s215 = smul.addr %s214, 8
        %s216 = smul.addr %s215, 8
        %s217 = scalar_lea.vmem %s1, %s216
        %s218 = sadd.s32 %s19, %s20
      $region32: #{_gan_loss_impl.1} parent=23 // pred_fallthru
        _
    $region24: #{_gan_loss_impl.1} parent=5 // pred_fallthru
      _
    %p219 = scmp.le.s32.totalorder 1, %s12
    %p220 = scmp.lt.s32.totalorder %s12, 3
    %p221 = pnand %p219, %p220
    %p222 = pneg %p221
    // Predicated region
    $region33: #{_gan_loss_impl.1} parent=5 // pred_check
      _
    $region34: #{_gan_loss_impl.1} parent=5 // pred_check_branch
      %224 = sbr.rel (%p221) target = $region36
    $region35: #{_gan_loss_impl.1} parent=5 // pred_region
      %s225 = ssub.s32 %s12, 1
      %s226 = sadd.s32 %s21, %s22
      %p227 = scmp.lt.s32.totalorder %s226, 1
      %s228 = scalar_select %p227, %s226, 1
      %s229 = smul.addr %s228, 8
      %s230 = smul.addr %s229, 8
      %s231 = scalar_lea.vmem %s0, %s230
      %p232 = pneg %p52
      %p233 = pneg %p49
      %s234 = sadd.s32 %s21, %s22
      %p235 = scmp.lt.s32.totalorder %s234, 1
      %s236 = scalar_select %p235, %s234, 1
      %s237 = smul.addr %s236, 8
      %s238 = smul.addr %s237, 8
      %s239 = scalar_lea.vmem %s1, %s238
      %p240 = pneg %p80
      %p241 = pneg %p77
      %p242 = pneg %p101
      %p243 = pneg %p98
      %p244 = pneg %p122
      %p245 = pneg %p119
      %p246 = pneg %p148
      %p247 = pneg %p145
      %p248 = scmp.lt.s32.totalorder %s21, 1
      %s249 = scalar_select %p248, %s21, 1
      %s250 = smul.addr %s249, 8
      %s251 = smul.addr %s250, 8
      %s252 = scalar_lea.vmem %s4, %s251
      %p253 = pneg %p174
      %p254 = pneg %p171
      %p255 = scmp.lt.s32.totalorder %s21, 1
      %s256 = scalar_select %p255, %s21, 1
      %s257 = smul.addr %s256, 8
      %s258 = scalar_lea.vmem %s5, %s257
      %s259 = sadd.s32 %s21, %s22
      %p260 = scmp.lt.s32.totalorder %s259, 1
      %s261 = scalar_select %p260, %s259, 1
      %s262 = smul.addr %s261, 8
      %s263 = smul.addr %s262, 8
      %s264 = scalar_lea.vmem %s0, %s263
      %s265 = sadd.s32 %s21, %s22
      %s266 = sadd.s32 %s21, %s22
      %p267 = scmp.lt.s32.totalorder %s266, 1
      %s268 = scalar_select %p267, %s266, 1
      %s269 = smul.addr %s268, 8
      %s270 = smul.addr %s269, 8
      %s271 = scalar_lea.vmem %s1, %s270
      %s272 = sadd.s32 %s21, %s22
      %p273 = scmp.lt.s32.totalorder %s21, 1
      %s274 = scalar_select %p273, %s21, 1
      %s275 = smul.addr %s274, 8
      %s276 = smul.addr %s275, 8
      %s277 = scalar_lea.vmem %s4, %s276
      %p278 = scmp.lt.s32.totalorder %s21, 1
      %s279 = scalar_select %p278, %s21, 1
      %s280 = smul.addr %s279, 8
      %s281 = scalar_lea.vmem %s5, %s280
      %p282 = scmp.eq.s32.totalorder %s22, 0
      // Predicated region
      $region37: #{_gan_loss_impl.1} parent=35 // pred_check
        %p283 = pneg %p282
      $region38: #{_gan_loss_impl.1} parent=35 // pred_check_branch
        %285 = sbr.rel (%p283) target = $region40
      $region39: #{_gan_loss_impl.1} parent=35 // pred_region
        %286 = vst [vmem:[#allocation2] sm:$0xff] 0.0
      $region40: #{_gan_loss_impl.1} parent=35 // pred_fallthru
        _
      %v287 = vld [vmem:[%s264] sm:$0xff]
      %v288 = vld [vmem:[%s264 + $0x8] sm:$0xff]
      %v289 = vld [vmem:[%s264 + $0x10] sm:$0xff]
      %v290 = vld [vmem:[%s264 + $0x18] sm:$0xff]
      %v291 = vld [vmem:[%s264 + $0x20] sm:$0xff]
      %v292 = vld [vmem:[%s264 + $0x28] sm:$0xff]
      %v293 = vld [vmem:[%s264 + $0x30] sm:$0xff]
      %v294 = vld [vmem:[%s264 + $0x38] sm:$0xff]
      %v295 = vld [vmem:[%s271] sm:$0xff]
      %v296 = vld [vmem:[%s271 + $0x8] sm:$0xff]
      %v297 = vld [vmem:[%s271 + $0x10] sm:$0xff]
      %v298 = vld [vmem:[%s271 + $0x18] sm:$0xff]
      %v299 = vld [vmem:[%s271 + $0x20] sm:$0xff]
      %v300 = vld [vmem:[%s271 + $0x28] sm:$0xff]
      %v301 = vld [vmem:[%s271 + $0x30] sm:$0xff]
      %v302 = vld [vmem:[%s271 + $0x38] sm:$0xff]
      %v303 = vsub.f32 %v287, %v295
      %v304 = vsub.f32 %v288, %v296
      %v305 = vsub.f32 %v289, %v297
      %v306 = vsub.f32 %v290, %v298
      %v307 = vsub.f32 %v291, %v299
      %v308 = vsub.f32 %v292, %v300
      %v309 = vsub.f32 %v293, %v301
      %v310 = vsub.f32 %v294, %v302
      %v311 = vld [vmem:[#allocation2] sm:$0xff]
      %v312 = vmul.f32 %v303, %v303
      %v313 = vmul.f32 %v304, %v304
      %v314 = vmul.f32 %v305, %v305
      %v315 = vmul.f32 %v306, %v306
      %v316 = vmul.f32 %v307, %v307
      %v317 = vmul.f32 %v308, %v308
      %v318 = vmul.f32 %v309, %v309
      %v319 = vmul.f32 %v310, %v310
      %v320 = vrot.slane %v312, 4
      %v321 = vadd.f32 %v312, %v320
      %v322 = vrot.slane %v321, 2
      %v323 = vadd.f32 %v321, %v322
      %v324 = vrot.slane %v323, 1
      %v325 = vadd.f32 %v323, %v324
      %v326 = vrot.slane %v313, 4
      %v327 = vadd.f32 %v313, %v326
      %v328 = vrot.slane %v327, 2
      %v329 = vadd.f32 %v327, %v328
      %v330 = vrot.slane %v329, 1
      %v331 = vadd.f32 %v329, %v330
      %v332 = vrot.slane %v314, 4
      %v333 = vadd.f32 %v314, %v332
      %v334 = vrot.slane %v333, 2
      %v335 = vadd.f32 %v333, %v334
      %v336 = vrot.slane %v335, 1
      %v337 = vadd.f32 %v335, %v336
      %v338 = vrot.slane %v315, 4
      %v339 = vadd.f32 %v315, %v338
      %v340 = vrot.slane %v339, 2
      %v341 = vadd.f32 %v339, %v340
      %v342 = vrot.slane %v341, 1
      %v343 = vadd.f32 %v341, %v342
      %v344 = vrot.slane %v316, 4
      %v345 = vadd.f32 %v316, %v344
      %v346 = vrot.slane %v345, 2
      %v347 = vadd.f32 %v345, %v346
      %v348 = vrot.slane %v347, 1
      %v349 = vadd.f32 %v347, %v348
      %v350 = vrot.slane %v317, 4
      %v351 = vadd.f32 %v317, %v350
      %v352 = vrot.slane %v351, 2
      %v353 = vadd.f32 %v351, %v352
      %v354 = vrot.slane %v353, 1
      %v355 = vadd.f32 %v353, %v354
      %v356 = vrot.slane %v318, 4
      %v357 = vadd.f32 %v318, %v356
      %v358 = vrot.slane %v357, 2
      %v359 = vadd.f32 %v357, %v358
      %v360 = vrot.slane %v359, 1
      %v361 = vadd.f32 %v359, %v360
      %v362 = vrot.slane %v319, 4
      %v363 = vadd.f32 %v319, %v362
      %v364 = vrot.slane %v363, 2
      %v365 = vadd.f32 %v363, %v364
      %v366 = vrot.slane %v365, 1
      %v367 = vadd.f32 %v365, %v366
      %v376 = vcombine.low %v325, %v331
      %v377 = vcombine.low %v337, %v343
      %v378 = vcombine.low %v349, %v355
      %v379 = vcombine.low %v361, %v367
      %v381 = vunpack.c.l.s4 1966171168
      %v382 = vunpack.c.0.s8 %v381
      %v383 = vlaneseq
      %v384 = vshrl.u32 %v383, 7
      %v385 = vsub.s32 %v382, %v384
      %v386 = vrot.slane %v376, %v385
      %v388 = vunpack.c.l.s4 1966171168
      %v389 = vunpack.c.0.s8 %v388
      %v390 = vlaneseq
      %v391 = vshrl.u32 %v390, 7
      %v392 = vsub.s32 %v389, %v391
      %v393 = vrot.slane %v377, %v392
      %v395 = vunpack.c.l.s4 1966171168
      %v396 = vunpack.c.0.s8 %v395
      %v397 = vlaneseq
      %v398 = vshrl.u32 %v397, 7
      %v399 = vsub.s32 %v396, %v398
      %v400 = vrot.slane %v378, %v399
      %v402 = vunpack.c.l.s4 1966171168
      %v403 = vunpack.c.0.s8 %v402
      %v404 = vlaneseq
      %v405 = vshrl.u32 %v404, 7
      %v406 = vsub.s32 %v403, %v405
      %v407 = vrot.slane %v379, %v406
      %v408 = vcombine.low %v386, %v393
      %v409 = vcombine.low %v400, %v407
      %v411 = vunpack.c.l.s4 1966171168
      %v412 = vunpack.c.0.s8 %v411
      %v413 = vlaneseq
      %v414 = vshrl.u32 %v413, 7
      %v415 = vsub.s32 %v412, %v414
      %v416 = vrot.slane %v408, %v415
      %v418 = vunpack.c.l.s4 1966171168
      %v419 = vunpack.c.0.s8 %v418
      %v420 = vlaneseq
      %v421 = vshrl.u32 %v420, 7
      %v422 = vsub.s32 %v419, %v421
      %v423 = vrot.slane %v409, %v422
      %v424 = vcombine.low %v416, %v423
      %v426 = vadd.f32 %v311, %v424
      %427 = vst [vmem:[#allocation2] sm:$0xff] %v426
      // Predicated region
      $region41: #{_gan_loss_impl.1} parent=35 // pred_check
        %p428 = pneg %p282
      $region42: #{_gan_loss_impl.1} parent=35 // pred_check_branch
        %430 = sbr.rel (%p428) target = $region44
      $region43: #{_gan_loss_impl.1} parent=35 // pred_region
        %431 = vst [vmem:[%s277] sm:$0xff] 0.0
        %432 = vst [vmem:[%s277 + $0x8] sm:$0xff] 0.0
        %433 = vst [vmem:[%s277 + $0x10] sm:$0xff] 0.0
        %434 = vst [vmem:[%s277 + $0x18] sm:$0xff] 0.0
        %435 = vst [vmem:[%s277 + $0x20] sm:$0xff] 0.0
        %436 = vst [vmem:[%s277 + $0x28] sm:$0xff] 0.0
        %437 = vst [vmem:[%s277 + $0x30] sm:$0xff] 0.0
        %438 = vst [vmem:[%s277 + $0x38] sm:$0xff] 0.0
        %v439 = vld [vmem:[#allocation2] sm:$0xff]
        %440 = vst [vmem:[%s277] ss:$8 sm:$0xf] %v439
        %441 = vst [vmem:[%s277] ss:$8 sm:$0xf0] %v439
        %v442 = vld [vmem:[%s2] sm:$0x3]
        %v443 = vld [vmem:[%s3] sm:$0x3]
        %v444 = vlog2.pop %v442
        %v445 = vmul.f32 %v444, 0.6931472
        %v446 = vmax.f32 %v445, -100.0
        %v447 = vsub.f32 1.0, %v442
        %v448 = vlog2.pop %v447
        %v449 = vmul.f32 %v448, 0.6931472
        %v450 = vmax.f32 %v449, -100.0
        %v451 = vmul.f32 %v443, %v446
        %v452 = vsub.f32 1.0, %v443
        %v453 = vmul.f32 %v452, %v450
        %v454 = vadd.f32 %v451, %v453
        %v455 = vsub.f32 0.0, %v454
        %vm456 = vcmask 1024
        %v457 = vsel %vm456, %v455, 0.0
        %458 = vadd.xlane.f32.xlu0 %v457
        %v459 = vpop.xlane.xlu0 %458
        %v460 = vrot.slane %v459, 4
        %v461 = vadd.f32 %v459, %v460
        %v462 = vrot.slane %v461, 2
        %v463 = vadd.f32 %v461, %v462
        %v464 = vrot.slane %v463, 1
        %v465 = vadd.f32 %v463, %v464
        %s466 = vtos %v465
        %v467 = vrcp.pop 2.0
        %s468 = vtos %v467
        %s469 = smul.f32 %s466, %s468
        %s470 = ssub.f32 0.0, %s469
        %v471 = vstv %s470
        %472 = vst [vmem:[%s281] sm:$0xff] %v471
      $region44: #{_gan_loss_impl.1} parent=35 // pred_fallthru
        _
      %p473 = scmp.lt.s32.totalorder %s21, 1
      %s474 = scalar_select %p473, %s21, 1
      %s475 = smul.addr %s474, 8
      %s476 = smul.addr %s475, 8
      %s477 = scalar_lea.vmem %s4, %s476
      %p478 = scmp.lt.s32.totalorder %s21, 1
      %s479 = scalar_select %p478, %s21, 1
      %s480 = smul.addr %s479, 8
      %s481 = scalar_lea.vmem %s5, %s480
      // Predicated region
      $region45: #{_gan_loss_impl.1} parent=35 // pred_check
        %p482 = pneg %p145
      $region46: #{_gan_loss_impl.1} parent=35 // pred_check_branch
        %484 = sbr.rel (%p482) target = $region48
      $region47: #{_gan_loss_impl.1} parent=35 // pred_region
        _
      $region48: #{_gan_loss_impl.1} parent=35 // pred_fallthru
        _
      // Predicated region
      $region49: #{_gan_loss_impl.1} parent=35 // pred_check
        %p485 = pneg %p171
      $region50: #{_gan_loss_impl.1} parent=35 // pred_check_branch
        %487 = sbr.rel (%p485) target = $region52
      $region51: #{_gan_loss_impl.1} parent=35 // pred_region
        _
      $region52: #{_gan_loss_impl.1} parent=35 // pred_fallthru
        _
    $region36: #{_gan_loss_impl.1} parent=5 // pred_fallthru
      _
    %p488 = scmp.le.s32.totalorder 2, %s12
    // Predicated region
    $region53: #{_gan_loss_impl.1} parent=5 // pred_check
      %p489 = pneg %p488
    $region54: #{_gan_loss_impl.1} parent=5 // pred_check_branch
      %491 = sbr.rel (%p489) target = $region56
    $region55: #{_gan_loss_impl.1} parent=5 // pred_region
      %s492 = ssub.s32 %s12, 2
      // Predicated region
      $region57: #{_gan_loss_impl.1} parent=55 // pred_check
        %p493 = pneg %p151
      $region58: #{_gan_loss_impl.1} parent=55 // pred_check_branch
        %495 = sbr.rel (%p493) target = $region60
      $region59: #{_gan_loss_impl.1} parent=55 // pred_region
        %p496 = scmp.lt.s32.totalorder %s23, 1
        %s497 = scalar_select %p496, %s23, 1
        %s498 = smul.addr %s497, 8
        %s499 = smul.addr %s498, 8
        %s500 = scalar_lea.vmem %s4, %s499
      $region60: #{_gan_loss_impl.1} parent=55 // pred_fallthru
        _
      // Predicated region
      $region61: #{_gan_loss_impl.1} parent=55 // pred_check
        %p501 = pneg %p177
      $region62: #{_gan_loss_impl.1} parent=55 // pred_check_branch
        %503 = sbr.rel (%p501) target = $region64
      $region63: #{_gan_loss_impl.1} parent=55 // pred_region
        %p504 = scmp.lt.s32.totalorder %s23, 1
        %s505 = scalar_select %p504, %s23, 1
        %s506 = smul.addr %s505, 8
        %s507 = scalar_lea.vmem %s5, %s506
      $region64: #{_gan_loss_impl.1} parent=55 // pred_fallthru
        _
    $region56: #{_gan_loss_impl.1} parent=5 // pred_fallthru
      _
  $region6: #{_gan_loss_impl.1} parent=0 // loop_footer
    %s16 = sadd.s32 1, %s12
  $region7: #{_gan_loss_impl.1} parent=0 // loop_footer_branch
    %11 = sbr.rel target = $region3
  $region8: #{_gan_loss_impl.1} parent=0 // loop_exit
    _

</llo_original>
